<compile_context>
chip_gen: v7x
topology: tpu7x:2x2x1
jax: 0.10.0
libtpu: 0.0.40
codegen_flags: <defaults>
</compile_context>

<pallas_src>
import jax
import jax.numpy as jnp
from jax.experimental import pallas as pl
from jax.experimental.pallas import tpu as pltpu


def _mish_kernel(x_ref, o_ref):
    x = x_ref[...].astype(jnp.float32)
    # PyTorch F.softplus semantics (beta=1, threshold=20): softplus(x)=x for x>20,
    # and tanh(x>20) == 1.0 in f32, so the branch reduces to y = x.
    # Otherwise, with t = exp(x) and u = 1 + t:
    #   tanh(log(u)) = (u^2 - 1) / (u^2 + 1) = t*(t+2) / (t*(t+2) + 2)
    t = jnp.exp(jnp.minimum(x, 20.0))          # clamp avoids overflow in untaken branch
    num = t * (t + 2.0)
    tanh_sp = num * pl.reciprocal(num + 2.0, approx=False)
    y = jnp.where(x > 20.0, x, x * tanh_sp)
    o_ref[...] = y.astype(o_ref.dtype)


def mish(x, *, tile_rows=4096, lanes=128):
    """Applies Mish elementwise to an arbitrary-shaped array via a Pallas kernel."""
    orig_shape = x.shape
    orig_dtype = x.dtype
    n = x.size

    if n % lanes == 0:
        # Fast path: no padding, no trailing slice — pure reshape (bitcast).
        rows = n // lanes
        slab = x.reshape(rows, lanes)
        ragged = False
    else:
        # Only the sub-128 lane remainder is padded; rows are never padded.
        n_pad = pl.cdiv(n, lanes) * lanes
        rows = n_pad // lanes
        slab = jnp.pad(x.reshape(-1), (0, n_pad - n)).reshape(rows, lanes)
        ragged = True

    # Block sized for ~2 MiB (f32) / ~1 MiB (bf16); shrink to the full extent
    # for small inputs (block equal to full dim is always legal).
    block_rows = min(tile_rows, rows)
    grid = (pl.cdiv(rows, block_rows),)

    out = pl.pallas_call(
        _mish_kernel,
        out_shape=jax.ShapeDtypeStruct((rows, lanes), orig_dtype),
        grid=grid,
        in_specs=[pl.BlockSpec((block_rows, lanes), lambda i: (i, 0))],
        out_specs=pl.BlockSpec((block_rows, lanes), lambda i: (i, 0)),
        input_output_aliases={0: 0},
        compiler_params=pltpu.CompilerParams(
            dimension_semantics=("parallel",)),
    )(slab)

    if ragged:
        return out.reshape(-1)[:n].reshape(orig_shape)
    return out.reshape(orig_shape)


def _mish_ref(x):
    # Reference matching PyTorch x.mul(F.softplus(x).tanh()).
    sp = jnp.where(x > 20.0, x, jnp.log1p(jnp.exp(jnp.minimum(x, 20.0))))
    return x * jnp.tanh(sp)


if __name__ == "__main__":
    key = jax.random.PRNGKey(0)

    # NCHW input (fast path: size divisible by 128).
    x = jax.random.normal(key, (2, 4, 16, 16), dtype=jnp.float32) * 5.0
    y = mish(x)
    jax.block_until_ready(y)
    assert y.shape == x.shape and y.dtype == x.dtype
    assert jnp.allclose(y, _mish_ref(x), atol=1e-5, rtol=1e-5)

    # Ragged-size input (exercises the lane-remainder pad path).
    x2 = jax.random.normal(jax.random.PRNGKey(1), (3, 5, 7), dtype=jnp.float32) * 5.0
    y2 = mish(x2)
    jax.block_until_ready(y2)
    assert y2.shape == x2.shape and y2.dtype == x2.dtype
    assert jnp.allclose(y2, _mish_ref(x2), atol=1e-5, rtol=1e-5)

    print("KERNEL_OK")
</pallas_src>

<mosaic_0001>
module attributes {stable_mosaic.version = 11 : i64} {
  func.func @_mish_kernel(%arg0: i32, %arg1: memref<16x128xf32, #tpu.memory_space<vmem>>, %arg2: memref<16x128xf32, #tpu.memory_space<vmem>>) attributes {dimension_semantics = [#tpu.dimension_semantics<parallel>], iteration_bounds = array<i64: 1>, scalar_prefetch = 0 : i64, scratch_operands = 0 : i64, tpu.core_type = #tpu.core_type<tc>, window_params = [{transform_indices = @transform_0, window_bounds = array<i64: 16, 128>}, {transform_indices = @transform_1, window_bounds = array<i64: 16, 128>}]} {
    %c0 = arith.constant 0 : index
    %c0_0 = arith.constant 0 : index
    %0 = vector.load %arg1[%c0, %c0_0] : memref<16x128xf32, #tpu.memory_space<vmem>>, vector<16x128xf32>
    %cst = arith.constant 2.000000e+01 : f32
    %1 = vector.broadcast %cst : f32 to vector<16x128xf32>
    %2 = arith.minimumf %0, %1 : vector<16x128xf32>
    %3 = math.exp %2 : vector<16x128xf32>
    %cst_1 = arith.constant 2.000000e+00 : f32
    %4 = vector.broadcast %cst_1 : f32 to vector<16x128xf32>
    %5 = arith.addf %3, %4 : vector<16x128xf32>
    %6 = arith.mulf %3, %5 : vector<16x128xf32>
    %cst_2 = arith.constant 2.000000e+00 : f32
    %7 = vector.broadcast %cst_2 : f32 to vector<16x128xf32>
    %8 = arith.addf %6, %7 : vector<16x128xf32>
    %9 = tpu.reciprocal %8 : vector<16x128xf32> -> vector<16x128xf32>
    %10 = arith.mulf %6, %9 : vector<16x128xf32>
    %cst_3 = arith.constant 2.000000e+01 : f32
    %11 = vector.broadcast %cst_3 : f32 to vector<16x128xf32>
    %12 = arith.cmpf ogt, %0, %11 : vector<16x128xf32>
    %13 = arith.mulf %0, %10 : vector<16x128xf32>
    %14 = arith.select %12, %0, %13 : vector<16x128xi1>, vector<16x128xf32>
    %c0_4 = arith.constant 0 : index
    %c0_5 = arith.constant 0 : index
    %15 = vector.load %arg2[%c0_4, %c0_5] : memref<16x128xf32, #tpu.memory_space<vmem>>, vector<16x128xf32>
    tpu.vector_store %arg2[%c0_4, %c0_5], %14 {strides = array<i32>} : memref<16x128xf32, #tpu.memory_space<vmem>>, vector<16x128xf32>,
    return
  }
  func.func @transform_0(%arg0: i32) -> (i32, i32) {
    %c0_i32 = arith.constant 0 : i32
    %c0_i32_0 = arith.constant 0 : i32
    return %arg0, %c0_i32 : i32, i32
  }
  func.func @transform_1(%arg0: i32) -> (i32, i32) {
    %c0_i32 = arith.constant 0 : i32
    %c0_i32_0 = arith.constant 0 : i32
    return %arg0, %c0_i32 : i32, i32
  }
}

</mosaic_0001>

<llo_original>
// kernel: tpu_custom_call.1
$region0: #{tpu_custom_call.1}
  #allocation0 [shape = 'u32[]', space=smem, size = 0x4, offset = 0x4, fixed_abs, tag = 'smem constant byte address 0x4 - core index']
  #allocation1 [shape = 'u32[144,128]{1,0:T(1,128)}', space=vmem, size = 0x12000, scoped, tag = 'internal scratch']
  %s0 = inlined_call_operand.hbm [shape: f32[16,128], index: 0, kind: input, shape index: {}, may-alias: {0,1}]
  %s1 = inlined_call_operand.hbm [shape: f32[16,128], index: 1, kind: output, shape index: {}, may-alias: {0,1}]
  %s2 = sld [smem:[#allocation0]]
  $region18: #{tpu_custom_call.1} parent=0
    _
  %s4 = ssub.s32 1, %s2
  %s5 = scalar_select 0, %s4, %s2
  $region1: #{tpu_custom_call.1} parent=0
    #allocation2 [shape = 'u8[8192]{0}', space=vmem, size = 0x2000, scoped, tag = 'input window, operand 0, single buffered']
    #allocation3 [shape = 's32[1]{0}', space=sflag, size = 0x4, scoped, tag = 'scoped memory for tpu_custom_call.1']
    #allocation4 [shape = 's32[1]{0}', space=sflag, size = 0x4, scoped, tag = 'scoped memory for tpu_custom_call.1']
    #allocation5 [shape = 'u8[8192]{0}', space=vmem, size = 0x2000, scoped, tag = 'output window, operand 0, single buffered']
    %6 = vsyncpa [#allocation3], 0
    %7 = vsyncpa [#allocation4], 0
    // Predicated region
    $region2: #{tpu_custom_call.1} parent=1 // pred_check
      _
    $region3: #{tpu_custom_call.1} parent=1 // pred_check_branch
      %9 = sbr.rel (0) target = $region5
    $region4: #{tpu_custom_call.1} parent=1 // pred_region
      %s11 = ssub.s32 256, 256
      %12 = vsyncadd [#allocation3], %s11
      %s13 = sshll.u32 [#allocation2], 4
      %s14 = int_to_ptr.vmem [resolvable:$true] %s13
      %19 = dma.hbm_to_vmem [thread:$0]  %s0, 256, %s14, [#allocation3], 128, 128, 8
    $region5: #{tpu_custom_call.1} parent=1 // pred_fallthru
      _
    // Predicated region
    $region6: #{tpu_custom_call.1} parent=1 // pred_check
      _
    $region7: #{tpu_custom_call.1} parent=1 // pred_check_branch
      %21 = sbr.rel (0) target = $region9
    $region8: #{tpu_custom_call.1} parent=1 // pred_region
      %22 = dma.done [#allocation3], 256
    $region9: #{tpu_custom_call.1} parent=1 // pred_fallthru
      _
    %v23 = vld [vmem:[#allocation2] sm:$0xff]
    %v24 = vld [vmem:[#allocation2 + $0x8] sm:$0xff]
    %v25 = vmin.f32 %v23, 20.0
    %v26 = vmin.f32 %v24, 20.0
    %v27 = vmul.f32 %v25, 1.442695
    %v28 = vpow.pop %v27
    %v29 = vmul.f32 %v26, 1.442695
    %v30 = vpow.pop %v29
    %v31 = vadd.f32 %v28, 2.0
    %v32 = vadd.f32 %v30, 2.0
    %v33 = vmul.f32 %v28, %v31
    %v34 = vmul.f32 %v30, %v32
    %v35 = vadd.f32 %v33, 2.0
    %v36 = vadd.f32 %v34, 2.0
    %v37 = vrcp.pop %v35
    %v38 = vrcp.pop %v36
    %v39 = vmul.f32 %v33, %v37
    %v40 = vmul.f32 %v34, %v38
    %vm41 = vcmp.gt.f32.partialorder %v23, 20.0
    %vm42 = vcmp.gt.f32.partialorder %v24, 20.0
    %v43 = vmul.f32 %v23, %v39
    %v44 = vmul.f32 %v24, %v40
    %v45 = vsel %vm41, %v23, %v43
    %v46 = vsel %vm42, %v24, %v44
    %47 = vst [vmem:[#allocation5] sm:$0xff] %v45
    %48 = vst [vmem:[#allocation5 + $0x8] sm:$0xff] %v46
    // Predicated region
    $region10: #{tpu_custom_call.1} parent=1 // pred_check
      _
    $region11: #{tpu_custom_call.1} parent=1 // pred_check_branch
      %50 = sbr.rel (0) target = $region13
    $region12: #{tpu_custom_call.1} parent=1 // pred_region
      %s52 = ssub.s32 256, 256
      %53 = vsyncadd [#allocation4], %s52
      %s54 = sshll.u32 [#allocation5], 4
      %s55 = int_to_ptr.vmem [resolvable:$true] %s54
      %60 = dma.vmem_to_hbm [thread:$0]  %s55, 256, %s1, [#allocation4], 128, 128, 8
    $region13: #{tpu_custom_call.1} parent=1 // pred_fallthru
      _
    // Predicated region
    $region14: #{tpu_custom_call.1} parent=1 // pred_check
      _
    $region15: #{tpu_custom_call.1} parent=1 // pred_check_branch
      %62 = sbr.rel (0) target = $region17
    $region16: #{tpu_custom_call.1} parent=1 // pred_region
      %63 = dma.done [#allocation4], 256
    $region17: #{tpu_custom_call.1} parent=1 // pred_fallthru
      _
    %64 = vsyncpa [#allocation3], 1
    %65 = vsyncpa [#allocation4], 1

</llo_original>
